<compile_context>
chip_gen: v7x
topology: tpu7x:2x2x1
jax: 0.10.0
libtpu: 0.0.40
codegen_flags: <defaults>
</compile_context>

<pallas_src>
import functools

import numpy as np
import jax
import jax.numpy as jnp
from jax import lax
from jax.experimental import pallas as pl
from jax.experimental.pallas import tpu as pltpu

B, H, C = 8, 32, 3          # batch, hidden dim, num classes
C_PAD = 128                 # lane-dense padding of the class dimension
SCL_TEMP = 0.5              # args.model['scl_temperature']
SR = 0.5                    # mixing ratio from forward()
NEG_PAD = -1e9              # bias value for padded logit lanes
VMEM_LIMIT = 4 * 1024 * 1024


def _vmem():
    return pl.BlockSpec(memory_space=pltpu.MemorySpace.VMEM)


# ---------------------------------------------------------------------------
# Kernel 1 (fused): classifier + mean softmax CE  +  supervised contrastive
#   inputs: features [B,H] f32, weight [H,128] bf16, bias [1,128] f32,
#           labels [B,1] int32  (one-hot / masks built in-kernel)
# ---------------------------------------------------------------------------
def fused_main_kernel(x_ref, w_ref, b_ref, lab_ref, logits_ref, loss_ref):
    x = x_ref[...]                                   # [B, H]      f32
    w = w_ref[...]                                   # [H, C_PAD]  bf16 (cols >= C are 0)
    b = b_ref[...]                                   # [1, C_PAD]  f32  (lanes >= C are NEG_PAD)
    labels = lab_ref[...]                            # [B, 1]      int32

    lane = lax.broadcasted_iota(jnp.int32, (B, C_PAD), 1)
    onehot = (lane == labels).astype(jnp.float32)    # [B, C_PAD], padded lanes 0

    # ---- classifier + mean softmax cross-entropy (lane-padded to 128) ----
    logits = jnp.dot(x.astype(jnp.bfloat16), w,
                     preferred_element_type=jnp.float32) + b           # [B, C_PAD]
    logits_ref[...] = logits                         # lane-dense store

    m = jnp.max(logits, axis=-1, keepdims=True)                        # [B, 1]
    lse = m + jnp.log(jnp.sum(jnp.exp(logits - m), axis=-1, keepdims=True))
    picked = jnp.sum(logits * onehot, axis=-1, keepdims=True)
    loss_ce = jnp.sum(lse - picked, axis=0, keepdims=True) * (1.0 / B)  # [1, 1]

    # ---- supervised contrastive loss (scl) ----
    sumsq = jnp.sum(x * x, axis=-1, keepdims=True)                     # [B, 1]
    inv_norm = lax.rsqrt(jnp.maximum(sumsq, 1e-16))   # ~ cosine_similarity eps
    unit = x * inv_norm                                                # [B, H]

    # cosine similarity matrix / temp -> [B, B]
    ub = unit.astype(jnp.bfloat16)
    cs = lax.dot_general(ub, ub, (((1,), (1,)), ((), ())),
                         preferred_element_type=jnp.float32) * (1.0 / SCL_TEMP)

    row_i = lax.broadcasted_iota(jnp.int32, (B, B), 0)
    col_i = lax.broadcasted_iota(jnp.int32, (B, B), 1)
    offdiag = (row_i != col_i).astype(jnp.float32)

    # shift-invariant logsumexp over off-diagonal entries
    cs_off = jnp.where(offdiag > 0.5, cs, -1e30)
    row_max = jnp.max(cs_off, axis=-1, keepdims=True)                  # [B, 1]
    row_sum = jnp.sum(jnp.exp(cs - row_max) * offdiag, axis=-1, keepdims=True)
    log_denom = jnp.log(row_sum) + row_max            # = log sum_{j!=i} exp(cs_ij)

    # same-label mask via exact 0/1 one-hot matmul (no host one-hot, no extra inputs)
    oh_b = onehot.astype(jnp.bfloat16)
    same = lax.dot_general(oh_b, oh_b, (((1,), (1,)), ((), ())),
                           preferred_element_type=jnp.float32)         # [B, B]
    mask = same * offdiag
    n_i = jnp.sum(mask, axis=-1, keepdims=True)                        # [B, 1]
    inner = jnp.sum(mask * (cs - log_denom), axis=-1, keepdims=True)   # [B, 1]
    per_row = jnp.where(n_i > 0.5, inner / (-jnp.maximum(n_i, 1.0)), 0.0)
    loss_scl = jnp.sum(per_row, axis=0, keepdims=True) * (1.0 / B)     # [1, 1]

    # pack both scalar losses lane-dense into one [1, 128] output
    lane1 = lax.broadcasted_iota(jnp.int32, (1, C_PAD), 1)
    loss_ref[...] = (jnp.where(lane1 == 0, loss_ce, 0.0) +
                     jnp.where(lane1 == 1, loss_scl, 0.0))


_fused_main_call = pl.pallas_call(
    fused_main_kernel,
    out_shape=(jax.ShapeDtypeStruct((B, C_PAD), jnp.float32),
               jax.ShapeDtypeStruct((1, C_PAD), jnp.float32)),
    in_specs=[_vmem()] * 4,
    out_specs=(_vmem(), _vmem()),
    compiler_params=pltpu.CompilerParams(vmem_limit_bytes=VMEM_LIMIT),
)


# ---------------------------------------------------------------------------
# Kernel 2: SEEL perturbation + classifier + cross-entropy
#   inputs: features [B,H] f32, weight [H,128] bf16, bias [1,128] f32,
#           idx [B,4] int32 (t_idx, c_idx, t_lab, pad), coeff [B,H] f32
# ---------------------------------------------------------------------------
def seel_kernel(x_ref, w_ref, b_ref, idx_ref, coeff_ref, loss_ref):
    x = x_ref[...]                                    # [B, H]
    idx = idx_ref[...]                                # [B, 4] int32
    coeff = coeff_ref[...]                            # [B, H]
    t_idx = idx[:, 0:1]                               # [B, 1]
    c_idx = idx[:, 1:2]
    t_lab = idx[:, 2:3]

    # gather rows via 0/1 selection matmuls built in-kernel (exact in bf16)
    col = lax.broadcasted_iota(jnp.int32, (B, B), 1)
    sel_t = (col == t_idx).astype(jnp.bfloat16)       # [B, B]
    sel_c = (col == c_idx).astype(jnp.bfloat16)
    xb = x.astype(jnp.bfloat16)
    target = jnp.dot(sel_t, xb, preferred_element_type=jnp.float32)    # [B, H]
    candidate = jnp.dot(sel_c, xb, preferred_element_type=jnp.float32)

    # target one-hot from the target label via lane-iota compare (no matmul)
    lane = lax.broadcasted_iota(jnp.int32, (B, C_PAD), 1)
    target_onehot = (lane == t_lab).astype(jnp.float32)                # [B, C_PAD]

    # TODO(synk): backbone.dropout treated as identity (p = 0).
    pert = target + coeff * (target - candidate)
    logits = jnp.dot(pert.astype(jnp.bfloat16), w_ref[...],
                     preferred_element_type=jnp.float32) + b_ref[...]

    m = jnp.max(logits, axis=-1, keepdims=True)
    lse = m + jnp.log(jnp.sum(jnp.exp(logits - m), axis=-1, keepdims=True))
    picked = jnp.sum(logits * target_onehot, axis=-1, keepdims=True)
    loss = jnp.sum(lse - picked, axis=0, keepdims=True) * (1.0 / B)    # [1, 1]

    lane1 = lax.broadcasted_iota(jnp.int32, (1, C_PAD), 1)
    loss_ref[...] = jnp.where(lane1 == 0, loss, 0.0)  # lane-dense [1, 128] store


_seel_call = pl.pallas_call(
    seel_kernel,
    out_shape=jax.ShapeDtypeStruct((1, C_PAD), jnp.float32),
    in_specs=[_vmem()] * 5,
    out_specs=_vmem(),
    compiler_params=pltpu.CompilerParams(vmem_limit_bytes=VMEM_LIMIT),
)


# ---------------------------------------------------------------------------
# Host-side helpers
# ---------------------------------------------------------------------------
def pad_classifier(w, b):
    """Pad [H,C]/[1,C] classifier params to C_PAD lanes ONCE at init.

    Weight is pre-cast to bf16 (padded columns zero); padded bias lanes are a
    large negative value so they never affect max / logsumexp / argmax.
    """
    w_pad = jnp.zeros((w.shape[0], C_PAD), jnp.float32).at[:, :C].set(w)
    b_pad = jnp.full((1, C_PAD), NEG_PAD, jnp.float32).at[:, :C].set(b)
    return w_pad.astype(jnp.bfloat16), b_pad


# ---------------------------------------------------------------------------
# Fully on-device forward (one jit segment per configuration)
# ---------------------------------------------------------------------------
@functools.partial(jax.jit, static_argnames=("stage", "use_scl", "use_seel"))
def _forward_device(features, labels, w_bf16, b_pad, key, *,
                    stage="train", use_scl=True, use_seel=True):
    lab_col = labels.reshape(B, 1).astype(jnp.int32)

    logits_pad, losses = _fused_main_call(features, w_bf16, b_pad, lab_col)
    loss_ce = losses[0, 0]
    loss_scl = losses[0, 1]

    loss_seel = jnp.float32(0.0)
    if stage == "train" and use_seel:
        # -------- on-device SEEL sampler (replaces numpy Counter/choice) ----
        k_t, k_c, k_rej, k_u = jax.random.split(key, 4)

        onehot_c = jax.nn.one_hot(labels, C, dtype=jnp.float32)        # [B, C]
        class_counts = onehot_c.sum(axis=0)                            # [C]
        present = class_counts > 0
        maxc = jnp.max(class_counts)
        prob_class = jnp.where(present, maxc / jnp.maximum(class_counts, 1.0), 0.0)
        prob_class = prob_class / jnp.sum(prob_class)
        row_counts = onehot_c @ class_counts                           # [B]
        target_prob = (onehot_c @ prob_class) / row_counts
        target_prob = target_prob / jnp.sum(target_prob)
        target_idx = jax.random.categorical(k_t, jnp.log(target_prob), shape=(B,))

        # candidate prob ∝ softmax(logits)[i, labels[i]] (padded lanes ≈ 0)
        sm = jax.nn.softmax(logits_pad, axis=-1)
        prob_idx = jnp.take_along_axis(sm, lab_col, axis=-1)[:, 0]     # [B]
        log_cand = jnp.log(prob_idx / jnp.sum(prob_idx))
        candidate_idx = jax.random.categorical(k_c, log_cand, shape=(B,))

        # rejection re-draw where candidate == target (bounded)
        def _cond(state):
            cand, _, it = state
            return jnp.logical_and(jnp.any(cand == target_idx), it < 64)

        def _body(state):
            cand, k, it = state
            k, sub = jax.random.split(k)
            new = jax.random.categorical(sub, log_cand, shape=(B,))
            return jnp.where(cand == target_idx, new, cand), k, it + 1

        candidate_idx, _, _ = lax.while_loop(
            _cond, _body, (candidate_idx, k_rej, jnp.int32(0)))

        t_lab = labels[target_idx]
        c_lab = labels[candidate_idx]
        same = t_lab == c_lab
        u = jax.random.uniform(k_u, (B, H), dtype=jnp.float32)
        coeff = jnp.where(same[:, None], u * 2.0 - 1.0, u - 0.5)       # [B, H]

        idx_pack = jnp.stack(
            [target_idx.astype(jnp.int32), candidate_idx.astype(jnp.int32),
             t_lab.astype(jnp.int32), jnp.zeros((B,), jnp.int32)],
            axis=-1)                                                   # [B, 4]

        loss_seel = _seel_call(features, w_bf16, b_pad, idx_pack, coeff)[0, 0]

    if stage == "train" and use_scl and use_seel:
        loss = (loss_ce * 0.1 + loss_scl * 0.9) * (1.0 - SR) + loss_seel * SR
    elif stage == "train" and use_scl and not use_seel:
        loss = loss_ce * 0.1 + loss_scl * 0.9
    else:
        loss = loss_ce

    preds = jnp.argmax(logits_pad, axis=-1)       # NEG_PAD lanes can never win
    logits = logits_pad[:, :C]                    # compiled slice (inside jit)
    return logits, loss, loss_ce, preds


def seel_forward(features, labels_np, w_bf16, b_pad, key, stage="train",
                 use_scl=True, use_seel=True):
    labels_np = np.asarray(labels_np, dtype=np.int32)
    labels = jnp.asarray(labels_np)                     # H2D only, no D2H sync
    logits, loss, loss_ce, preds = _forward_device(
        features, labels, w_bf16, b_pad, key,
        stage=stage, use_scl=use_scl, use_seel=use_seel)
    return {
        "cls": features,          # device array (no blocking D2H copy)
        "loss": loss,
        "loss_ce": loss_ce,
        "logits": logits,
        "labels": labels_np,
        "preds": preds,
    }


if __name__ == "__main__":
    key = jax.random.PRNGKey(0)
    k_feat, k_w, k_b, k_step = jax.random.split(key, 4)

    features = jax.random.normal(k_feat, (B, H), dtype=jnp.float32)
    labels_np = np.array([0, 0, 1, 1, 2, 2, 0, 1], dtype=np.int32)

    # classifier parameters (deterministic synthetic init), padded + bf16 once
    w = jax.random.normal(k_w, (H, C), dtype=jnp.float32) * 0.1
    b = jax.random.normal(k_b, (1, C), dtype=jnp.float32) * 0.01
    w_bf16, b_pad = pad_classifier(w, b)

    out = seel_forward(features, labels_np, w_bf16, b_pad, k_step, stage="train")

    jax.block_until_ready(out["loss"])
    jax.block_until_ready(out["logits"])
    jax.block_until_ready(out["preds"])
    assert np.isfinite(float(out["loss"]))
    assert np.all(np.isfinite(np.asarray(out["logits"])))
    print("KERNEL_OK")
</pallas_src>

<mosaic_0001>
module attributes {stable_mosaic.version = 11 : i64} {
  func.func @fused_main_kernel(%arg0: memref<8x32xf32, #tpu.memory_space<vmem>>, %arg1: memref<32x128xbf16, #tpu.memory_space<vmem>>, %arg2: memref<1x128xf32, #tpu.memory_space<vmem>>, %arg3: memref<8x1xi32, #tpu.memory_space<vmem>>, %arg4: memref<8x128xf32, #tpu.memory_space<vmem>>, %arg5: memref<1x128xf32, #tpu.memory_space<vmem>>) attributes {dimension_semantics = [], scalar_prefetch = 0 : i64, scratch_operands = 0 : i64, tpu.core_type = #tpu.core_type<tc>} {
    %c0 = arith.constant 0 : index
    %c0_0 = arith.constant 0 : index
    %0 = vector.load %arg0[%c0, %c0_0] : memref<8x32xf32, #tpu.memory_space<vmem>>, vector<8x32xf32>
    %c0_1 = arith.constant 0 : index
    %c0_2 = arith.constant 0 : index
    %1 = vector.load %arg1[%c0_1, %c0_2] : memref<32x128xbf16, #tpu.memory_space<vmem>>, vector<32x128xbf16>
    %c0_3 = arith.constant 0 : index
    %c0_4 = arith.constant 0 : index
    %2 = vector.load %arg2[%c0_3, %c0_4] : memref<1x128xf32, #tpu.memory_space<vmem>>, vector<1x128xf32>
    %c0_5 = arith.constant 0 : index
    %c0_6 = arith.constant 0 : index
    %3 = vector.load %arg3[%c0_5, %c0_6] : memref<8x1xi32, #tpu.memory_space<vmem>>, vector<8x1xi32>
    %4 = tpu.iota {dimensions = array<i32: 1>} : vector<8x128xi32>
    %5 = vector.broadcast %3 : vector<8x1xi32> to vector<8x128xi32>
    %6 = arith.cmpi eq, %4, %5 : vector<8x128xi32>
    %7 = arith.extui %6 : vector<8x128xi1> to vector<8x128xi32>
    %8 = arith.sitofp %7 : vector<8x128xi32> to vector<8x128xf32>
    %9 = arith.truncf %0 : vector<8x32xf32> to vector<8x32xbf16>
    %cst = arith.constant dense<0.000000e+00> : vector<8x128xf32>
    %10 = tpu.matmul %9, %1, %cst {dimension_numbers = #tpu.dot_dimension_numbers<[1], [0], [0], [1], [0, 0, 1, 1], [], []>} : vector<8x32xbf16>, vector<32x128xbf16>, vector<8x128xf32> -> vector<8x128xf32>
    %11 = vector.broadcast %2 : vector<1x128xf32> to vector<8x128xf32>
    %12 = arith.addf %10, %11 : vector<8x128xf32>
    %c0_7 = arith.constant 0 : index
    %c0_8 = arith.constant 0 : index
    %13 = vector.load %arg4[%c0_7, %c0_8] : memref<8x128xf32, #tpu.memory_space<vmem>>, vector<8x128xf32>
    tpu.vector_store %arg4[%c0_7, %c0_8], %12 {strides = array<i32>} : memref<8x128xf32, #tpu.memory_space<vmem>>, vector<8x128xf32>,
    %cst_9 = arith.constant dense<0xFF800000> : vector<8xf32>
    %14 = vector.multi_reduction <maximumf>, %12, %cst_9 [1] : vector<8x128xf32> to vector<8xf32>
    %15 = vector.shape_cast %14 : vector<8xf32> to vector<8x1xf32>
    %16 = vector.broadcast %15 : vector<8x1xf32> to vector<8x128xf32>
    %17 = arith.subf %12, %16 : vector<8x128xf32>
    %18 = math.exp %17 : vector<8x128xf32>
    %cst_10 = arith.constant dense<0.000000e+00> : vector<8xf32>
    %19 = vector.multi_reduction <add>, %18, %cst_10 [1] : vector<8x128xf32> to vector<8xf32>
    %20 = vector.shape_cast %19 : vector<8xf32> to vector<8x1xf32>
    %21 = math.log %20 : vector<8x1xf32>
    %22 = arith.addf %15, %21 : vector<8x1xf32>
    %23 = arith.mulf %12, %8 : vector<8x128xf32>
    %cst_11 = arith.constant dense<0.000000e+00> : vector<8xf32>
    %24 = vector.multi_reduction <add>, %23, %cst_11 [1] : vector<8x128xf32> to vector<8xf32>
    %25 = vector.shape_cast %24 : vector<8xf32> to vector<8x1xf32>
    %26 = arith.subf %22, %25 : vector<8x1xf32>
    %cst_12 = arith.constant dense<0.000000e+00> : vector<1xf32>
    %27 = vector.multi_reduction <add>, %26, %cst_12 [0] : vector<8x1xf32> to vector<1xf32>
    %28 = vector.shape_cast %27 : vector<1xf32> to vector<1x1xf32>
    %cst_13 = arith.constant 1.250000e-01 : f32
    %29 = vector.broadcast %cst_13 : f32 to vector<1x1xf32>
    %30 = arith.mulf %28, %29 : vector<1x1xf32>
    %31 = arith.mulf %0, %0 : vector<8x32xf32>
    %cst_14 = arith.constant dense<0.000000e+00> : vector<8xf32>
    %32 = vector.multi_reduction <add>, %31, %cst_14 [1] : vector<8x32xf32> to vector<8xf32>
    %33 = vector.shape_cast %32 : vector<8xf32> to vector<8x1xf32>
    %cst_15 = arith.constant 1.000000e-16 : f32
    %34 = vector.broadcast %cst_15 : f32 to vector<8x1xf32>
    %35 = arith.maximumf %33, %34 : vector<8x1xf32>
    %36 = math.rsqrt %35 : vector<8x1xf32>
    %37 = vector.broadcast %36 : vector<8x1xf32> to vector<8x32xf32>
    %38 = arith.mulf %0, %37 : vector<8x32xf32>
    %39 = arith.truncf %38 : vector<8x32xf32> to vector<8x32xbf16>
    %cst_16 = arith.constant dense<0.000000e+00> : vector<8x8xf32>
    %40 = tpu.matmul %39, %39, %cst_16 {dimension_numbers = #tpu.dot_dimension_numbers<[1], [1], [0], [0], [0, 0, 1, 0], [], []>} : vector<8x32xbf16>, vector<8x32xbf16>, vector<8x8xf32> -> vector<8x8xf32>
    %cst_17 = arith.constant 2.000000e+00 : f32
    %41 = vector.broadcast %cst_17 : f32 to vector<8x8xf32>
    %42 = arith.mulf %40, %41 : vector<8x8xf32>
    %43 = tpu.iota {dimensions = array<i32: 0>} : vector<8x8xi32>
    %44 = tpu.iota {dimensions = array<i32: 1>} : vector<8x8xi32>
    %45 = arith.cmpi ne, %43, %44 : vector<8x8xi32>
    %46 = arith.extui %45 : vector<8x8xi1> to vector<8x8xi32>
    %47 = arith.sitofp %46 : vector<8x8xi32> to vector<8x8xf32>
    %cst_18 = arith.constant 5.000000e-01 : f32
    %48 = vector.broadcast %cst_18 : f32 to vector<8x8xf32>
    %49 = arith.cmpf ogt, %47, %48 : vector<8x8xf32>
    %cst_19 = arith.constant -1.000000e+30 : f32
    %50 = vector.broadcast %cst_19 : f32 to vector<8x8xf32>
    %51 = arith.select %49, %42, %50 : vector<8x8xi1>, vector<8x8xf32>
    %cst_20 = arith.constant dense<0xFF800000> : vector<8xf32>
    %52 = vector.multi_reduction <maximumf>, %51, %cst_20 [1] : vector<8x8xf32> to vector<8xf32>
    %53 = vector.shape_cast %52 : vector<8xf32> to vector<8x1xf32>
    %54 = vector.broadcast %53 : vector<8x1xf32> to vector<8x8xf32>
    %55 = arith.subf %42, %54 : vector<8x8xf32>
    %56 = math.exp %55 : vector<8x8xf32>
    %57 = arith.mulf %56, %47 : vector<8x8xf32>
    %cst_21 = arith.constant dense<0.000000e+00> : vector<8xf32>
    %58 = vector.multi_reduction <add>, %57, %cst_21 [1] : vector<8x8xf32> to vector<8xf32>
    %59 = vector.shape_cast %58 : vector<8xf32> to vector<8x1xf32>
    %60 = math.log %59 : vector<8x1xf32>
    %61 = arith.addf %60, %53 : vector<8x1xf32>
    %62 = arith.truncf %8 : vector<8x128xf32> to vector<8x128xbf16>
    %cst_22 = arith.constant dense<0.000000e+00> : vector<8x8xf32>
    %63 = tpu.matmul %62, %62, %cst_22 {dimension_numbers = #tpu.dot_dimension_numbers<[1], [1], [0], [0], [0, 0, 1, 0], [], []>} : vector<8x128xbf16>, vector<8x128xbf16>, vector<8x8xf32> -> vector<8x8xf32>
    %64 = arith.mulf %63, %47 : vector<8x8xf32>
    %cst_23 = arith.constant dense<0.000000e+00> : vector<8xf32>
    %65 = vector.multi_reduction <add>, %64, %cst_23 [1] : vector<8x8xf32> to vector<8xf32>
    %66 = vector.shape_cast %65 : vector<8xf32> to vector<8x1xf32>
    %67 = vector.broadcast %61 : vector<8x1xf32> to vector<8x8xf32>
    %68 = arith.subf %42, %67 : vector<8x8xf32>
    %69 = arith.mulf %64, %68 : vector<8x8xf32>
    %cst_24 = arith.constant dense<0.000000e+00> : vector<8xf32>
    %70 = vector.multi_reduction <add>, %69, %cst_24 [1] : vector<8x8xf32> to vector<8xf32>
    %71 = vector.shape_cast %70 : vector<8xf32> to vector<8x1xf32>
    %cst_25 = arith.constant 5.000000e-01 : f32
    %72 = vector.broadcast %cst_25 : f32 to vector<8x1xf32>
    %73 = arith.cmpf ogt, %66, %72 : vector<8x1xf32>
    %cst_26 = arith.constant 1.000000e+00 : f32
    %74 = vector.broadcast %cst_26 : f32 to vector<8x1xf32>
    %75 = arith.maximumf %66, %74 : vector<8x1xf32>
    %cst_27 = arith.constant 0.000000e+00 : f32
    %76 = vector.broadcast %cst_27 : f32 to vector<8x1xf32>
    %77 = arith.subf %76, %75 : vector<8x1xf32>
    %78 = arith.divf %71, %77 : vector<8x1xf32>
    %cst_28 = arith.constant 0.000000e+00 : f32
    %79 = vector.broadcast %cst_28 : f32 to vector<8x1xf32>
    %80 = arith.select %73, %78, %79 : vector<8x1xi1>, vector<8x1xf32>
    %cst_29 = arith.constant dense<0.000000e+00> : vector<1xf32>
    %81 = vector.multi_reduction <add>, %80, %cst_29 [0] : vector<8x1xf32> to vector<1xf32>
    %82 = vector.shape_cast %81 : vector<1xf32> to vector<1x1xf32>
    %cst_30 = arith.constant 1.250000e-01 : f32
    %83 = vector.broadcast %cst_30 : f32 to vector<1x1xf32>
    %84 = arith.mulf %82, %83 : vector<1x1xf32>
    %85 = tpu.iota {dimensions = array<i32: 1>} : vector<1x128xi32>
    %c0_i32 = arith.constant 0 : i32
    %86 = vector.broadcast %c0_i32 : i32 to vector<1x128xi32>
    %87 = arith.cmpi eq, %85, %86 : vector<1x128xi32>
    %cst_31 = arith.constant 0.000000e+00 : f32
    %88 = vector.shape_cast %30 : vector<1x1xf32> to vector<1x1xf32>
    %89 = vector.broadcast %88 : vector<1x1xf32> to vector<1x128xf32>
    %90 = vector.broadcast %cst_31 : f32 to vector<1x128xf32>
    %91 = arith.select %87, %89, %90 : vector<1x128xi1>, vector<1x128xf32>
    %c1_i32 = arith.constant 1 : i32
    %92 = vector.broadcast %c1_i32 : i32 to vector<1x128xi32>
    %93 = arith.cmpi eq, %85, %92 : vector<1x128xi32>
    %cst_32 = arith.constant 0.000000e+00 : f32
    %94 = vector.shape_cast %84 : vector<1x1xf32> to vector<1x1xf32>
    %95 = vector.broadcast %94 : vector<1x1xf32> to vector<1x128xf32>
    %96 = vector.broadcast %cst_32 : f32 to vector<1x128xf32>
    %97 = arith.select %93, %95, %96 : vector<1x128xi1>, vector<1x128xf32>
    %98 = arith.addf %91, %97 : vector<1x128xf32>
    %c0_33 = arith.constant 0 : index
    %c0_34 = arith.constant 0 : index
    %99 = vector.load %arg5[%c0_33, %c0_34] : memref<1x128xf32, #tpu.memory_space<vmem>>, vector<1x128xf32>
    tpu.vector_store %arg5[%c0_33, %c0_34], %98 {strides = array<i32>} : memref<1x128xf32, #tpu.memory_space<vmem>>, vector<1x128xf32>,
    return
  }
}

module attributes {stable_mosaic.version = 11 : i64} {
  func.func @seel_kernel(%arg0: memref<8x32xf32, #tpu.memory_space<vmem>>, %arg1: memref<32x128xbf16, #tpu.memory_space<vmem>>, %arg2: memref<1x128xf32, #tpu.memory_space<vmem>>, %arg3: memref<8x4xi32, #tpu.memory_space<vmem>>, %arg4: memref<8x32xf32, #tpu.memory_space<vmem>>, %arg5: memref<1x128xf32, #tpu.memory_space<vmem>>) attributes {dimension_semantics = [], scalar_prefetch = 0 : i64, scratch_operands = 0 : i64, tpu.core_type = #tpu.core_type<tc>} {
    %c0 = arith.constant 0 : index
    %c0_0 = arith.constant 0 : index
    %0 = vector.load %arg0[%c0, %c0_0] : memref<8x32xf32, #tpu.memory_space<vmem>>, vector<8x32xf32>
    %c0_1 = arith.constant 0 : index
    %c0_2 = arith.constant 0 : index
    %1 = vector.load %arg3[%c0_1, %c0_2] : memref<8x4xi32, #tpu.memory_space<vmem>>, vector<8x4xi32>
    %c0_3 = arith.constant 0 : index
    %c0_4 = arith.constant 0 : index
    %2 = vector.load %arg4[%c0_3, %c0_4] : memref<8x32xf32, #tpu.memory_space<vmem>>, vector<8x32xf32>
    %3 = vector.extract_strided_slice %1 {offsets = [0, 0], sizes = [8, 1], strides = [1, 1]} : vector<8x4xi32> to vector<8x1xi32>
    %4 = vector.extract_strided_slice %1 {offsets = [0, 1], sizes = [8, 1], strides = [1, 1]} : vector<8x4xi32> to vector<8x1xi32>
    %5 = vector.extract_strided_slice %1 {offsets = [0, 2], sizes = [8, 1], strides = [1, 1]} : vector<8x4xi32> to vector<8x1xi32>
    %6 = tpu.iota {dimensions = array<i32: 1>} : vector<8x8xi32>
    %7 = vector.broadcast %3 : vector<8x1xi32> to vector<8x8xi32>
    %8 = arith.cmpi eq, %6, %7 : vector<8x8xi32>
    %9 = arith.extui %8 : vector<8x8xi1> to vector<8x8xi32>
    %10 = arith.sitofp %9 : vector<8x8xi32> to vector<8x8xf32>
    %11 = arith.truncf %10 : vector<8x8xf32> to vector<8x8xbf16>
    %12 = vector.broadcast %4 : vector<8x1xi32> to vector<8x8xi32>
    %13 = arith.cmpi eq, %6, %12 : vector<8x8xi32>
    %14 = arith.extui %13 : vector<8x8xi1> to vector<8x8xi32>
    %15 = arith.sitofp %14 : vector<8x8xi32> to vector<8x8xf32>
    %16 = arith.truncf %15 : vector<8x8xf32> to vector<8x8xbf16>
    %17 = arith.truncf %0 : vector<8x32xf32> to vector<8x32xbf16>
    %cst = arith.constant dense<0.000000e+00> : vector<8x32xf32>
    %18 = tpu.matmul %11, %17, %cst {dimension_numbers = #tpu.dot_dimension_numbers<[1], [0], [0], [1], [0, 0, 1, 1], [], []>} : vector<8x8xbf16>, vector<8x32xbf16>, vector<8x32xf32> -> vector<8x32xf32>
    %cst_5 = arith.constant dense<0.000000e+00> : vector<8x32xf32>
    %19 = tpu.matmul %16, %17, %cst_5 {dimension_numbers = #tpu.dot_dimension_numbers<[1], [0], [0], [1], [0, 0, 1, 1], [], []>} : vector<8x8xbf16>, vector<8x32xbf16>, vector<8x32xf32> -> vector<8x32xf32>
    %20 = tpu.iota {dimensions = array<i32: 1>} : vector<8x128xi32>
    %21 = vector.broadcast %5 : vector<8x1xi32> to vector<8x128xi32>
    %22 = arith.cmpi eq, %20, %21 : vector<8x128xi32>
    %23 = arith.extui %22 : vector<8x128xi1> to vector<8x128xi32>
    %24 = arith.sitofp %23 : vector<8x128xi32> to vector<8x128xf32>
    %25 = arith.subf %18, %19 : vector<8x32xf32>
    %26 = arith.mulf %2, %25 : vector<8x32xf32>
    %27 = arith.addf %18, %26 : vector<8x32xf32>
    %28 = arith.truncf %27 : vector<8x32xf32> to vector<8x32xbf16>
    %c0_6 = arith.constant 0 : index
    %c0_7 = arith.constant 0 : index
    %29 = vector.load %arg1[%c0_6, %c0_7] : memref<32x128xbf16, #tpu.memory_space<vmem>>, vector<32x128xbf16>
    %cst_8 = arith.constant dense<0.000000e+00> : vector<8x128xf32>
    %30 = tpu.matmul %28, %29, %cst_8 {dimension_numbers = #tpu.dot_dimension_numbers<[1], [0], [0], [1], [0, 0, 1, 1], [], []>} : vector<8x32xbf16>, vector<32x128xbf16>, vector<8x128xf32> -> vector<8x128xf32>
    %c0_9 = arith.constant 0 : index
    %c0_10 = arith.constant 0 : index
    %31 = vector.load %arg2[%c0_9, %c0_10] : memref<1x128xf32, #tpu.memory_space<vmem>>, vector<1x128xf32>
    %32 = vector.broadcast %31 : vector<1x128xf32> to vector<8x128xf32>
    %33 = arith.addf %30, %32 : vector<8x128xf32>
    %cst_11 = arith.constant dense<0xFF800000> : vector<8xf32>
    %34 = vector.multi_reduction <maximumf>, %33, %cst_11 [1] : vector<8x128xf32> to vector<8xf32>
    %35 = vector.shape_cast %34 : vector<8xf32> to vector<8x1xf32>
    %36 = vector.broadcast %35 : vector<8x1xf32> to vector<8x128xf32>
    %37 = arith.subf %33, %36 : vector<8x128xf32>
    %38 = math.exp %37 : vector<8x128xf32>
    %cst_12 = arith.constant dense<0.000000e+00> : vector<8xf32>
    %39 = vector.multi_reduction <add>, %38, %cst_12 [1] : vector<8x128xf32> to vector<8xf32>
    %40 = vector.shape_cast %39 : vector<8xf32> to vector<8x1xf32>
    %41 = math.log %40 : vector<8x1xf32>
    %42 = arith.addf %35, %41 : vector<8x1xf32>
    %43 = arith.mulf %33, %24 : vector<8x128xf32>
    %cst_13 = arith.constant dense<0.000000e+00> : vector<8xf32>
    %44 = vector.multi_reduction <add>, %43, %cst_13 [1] : vector<8x128xf32> to vector<8xf32>
    %45 = vector.shape_cast %44 : vector<8xf32> to vector<8x1xf32>
    %46 = arith.subf %42, %45 : vector<8x1xf32>
    %cst_14 = arith.constant dense<0.000000e+00> : vector<1xf32>
    %47 = vector.multi_reduction <add>, %46, %cst_14 [0] : vector<8x1xf32> to vector<1xf32>
    %48 = vector.shape_cast %47 : vector<1xf32> to vector<1x1xf32>
    %cst_15 = arith.constant 1.250000e-01 : f32
    %49 = vector.broadcast %cst_15 : f32 to vector<1x1xf32>
    %50 = arith.mulf %48, %49 : vector<1x1xf32>
    %51 = tpu.iota {dimensions = array<i32: 1>} : vector<1x128xi32>
    %c0_i32 = arith.constant 0 : i32
    %52 = vector.broadcast %c0_i32 : i32 to vector<1x128xi32>
    %53 = arith.cmpi eq, %51, %52 : vector<1x128xi32>
    %cst_16 = arith.constant 0.000000e+00 : f32
    %54 = vector.shape_cast %50 : vector<1x1xf32> to vector<1x1xf32>
    %55 = vector.broadcast %54 : vector<1x1xf32> to vector<1x128xf32>
    %56 = vector.broadcast %cst_16 : f32 to vector<1x128xf32>
    %57 = arith.select %53, %55, %56 : vector<1x128xi1>, vector<1x128xf32>
    %c0_17 = arith.constant 0 : index
    %c0_18 = arith.constant 0 : index
    %58 = vector.load %arg5[%c0_17, %c0_18] : memref<1x128xf32, #tpu.memory_space<vmem>>, vector<1x128xf32>
    tpu.vector_store %arg5[%c0_17, %c0_18], %57 {strides = array<i32>} : memref<1x128xf32, #tpu.memory_space<vmem>>, vector<1x128xf32>,
    return
  }
}

</mosaic_0001>

<llo_original>
// kernel: eq.12
$region0: #{eq.12}
  #allocation0 [shape = 's32[1]{0}', space=sflag, size = 0x4, scoped, tag = 'scoped memory for eq.12']
  %s0 = inlined_call_operand.vmem [shape: s32[8], index: 0, kind: input, shape index: {}]
  %s1 = inlined_call_operand.vmem [shape: s32[8], index: 1, kind: input, shape index: {}]
  %s2 = inlined_call_operand.vmem [shape: pred[8], index: 2, kind: output, shape index: {}]
  %v3 = vld [vmem:[%s0] sm:$0x1]
  %v4 = vld [vmem:[%s1] sm:$0x1]
  %5 = xla_tuple %v3, %v4
  %6 = xla_tuple %5
  %vm7 = vcmp.eq.s32.totalorder %v3, %v4
  %v8 = vsel %vm7, 1, 0
  %9 = xla_tuple %v8
  %v10 = vpack.c.b16 0, %v8
  %v11 = vpack.c.b8 0, %v10
  %13 = vst [vmem:[%s2] sm:$0x1] %v11

// kernel: _forward_device.4
$region0: #{_forward_device.4}
  #allocation0 [shape = 'u32[]', space=smem, size = 0x4, offset = 0x4, fixed_abs, tag = 'smem constant byte address 0x4 - core index']
  #allocation1 [shape = 'u32[144,128]{1,0:T(1,128)}', space=vmem, size = 0x12000, scoped, tag = 'internal scratch']
  %s0 = inlined_call_operand.vmem [shape: f32[8,32], index: 0, kind: input, shape index: {}]
  %s1 = inlined_call_operand.vmem [shape: bf16[32,128], index: 1, kind: input, shape index: {}]
  %s2 = inlined_call_operand.vmem [shape: f32[1,128], index: 2, kind: input, shape index: {}]
  %s3 = inlined_call_operand.vmem [shape: s32[8,1], index: 3, kind: input, shape index: {}]
  %s4 = inlined_call_operand.vmem [shape: f32[8,128], index: 4, kind: output, shape index: {0}]
  %s5 = inlined_call_operand.vmem [shape: f32[1,128], index: 5, kind: output, shape index: {1}]
  %6 = xla_tuple %s4, %s5
  %s7 = sld [smem:[#allocation0]]
  $region34: #{_forward_device.4} parent=0
    _
  %s9 = ssub.s32 1, %s7
  %s10 = scalar_select 0, %s9, %s7
  // Predicated region
  $region2: #{_forward_device.4} parent=0 // pred_check
    _
  $region3: #{_forward_device.4} parent=0 // pred_check_branch
    %12 = sbr.rel (0) target = $region5
  $region4: #{_forward_device.4} parent=0 // pred_region
    _
  $region5: #{_forward_device.4} parent=0 // pred_fallthru
    _
  // Predicated region
  $region6: #{_forward_device.4} parent=0 // pred_check
    _
  $region7: #{_forward_device.4} parent=0 // pred_check_branch
    %14 = sbr.rel (0) target = $region9
  $region8: #{_forward_device.4} parent=0 // pred_region
    _
  $region9: #{_forward_device.4} parent=0 // pred_fallthru
    _
  // Predicated region
  $region10: #{_forward_device.4} parent=0 // pred_check
    _
  $region11: #{_forward_device.4} parent=0 // pred_check_branch
    %16 = sbr.rel (0) target = $region13
  $region12: #{_forward_device.4} parent=0 // pred_region
    _
  $region13: #{_forward_device.4} parent=0 // pred_fallthru
    _
  // Predicated region
  $region14: #{_forward_device.4} parent=0 // pred_check
    _
  $region15: #{_forward_device.4} parent=0 // pred_check_branch
    %18 = sbr.rel (0) target = $region17
  $region16: #{_forward_device.4} parent=0 // pred_region
    _
  $region17: #{_forward_device.4} parent=0 // pred_fallthru
    _
  %v20 = vld [vmem:[%s0] sm:$0xff]
  %v21 = vld [vmem:[%s1] sm:$0xf]
  %v22 = vld [vmem:[%s1 + $0x4] sm:$0xf]
  %v23 = vld [vmem:[%s1 + $0x8] sm:$0xf]
  %v24 = vld [vmem:[%s1 + $0xc] sm:$0xf]
  %v25 = vld [vmem:[%s2] sm:$0x1]
  %v26 = vld [vmem:[%s3] sm:$0xff]
  %v27 = vlaneseq
  %v28 = vand.u32 %v27, 127
  %29 = vset.pattern.permute.xlu0 0
  %30 = vperm.xlu0 %29, %v26
  %v31 = vpop.permute.xlu0 %30
  %vm32 = vcmp.eq.s32.totalorder %v28, %v31
  %v33 = vsel %vm32, 1, 0
  %v34 = vcvt.s32.f32 %v33
  %v35 = vpack.c.bf16 %v20, %v20
  %v37 = vlaneseq
  %v38 = vshrl.u32 %v37, 7
  %v39 = vsub.s32 0, %v38
  %v40 = vrot.slane %v25, %v39
  %v46 = vunpack.c.l.b16 %v21
  %v47 = vunpack.c.l.b16 %v22
  %v48 = vunpack.c.l.b16 %v23
  %v49 = vunpack.c.l.b16 %v24
  %v50 = vpack.c.b16 %v47, %v46
  %v51 = vpack.c.b16 %v49, %v48
  %vm54 = vcmask 261120
  %v56 = vsel %vm54, %v35, 0
  %58 = vmatprep.subr.bf16.mxu0 0
  %59 = vmatpush1.bf16.msra.mxu0 %v50
  %60 = vmatprep.subr.bf16.mxu0 0
  %61 = vmatpush1.bf16.msra.mxu0 %v51
  %62 = vmatprep.subr.bf16.mxu0 0
  %63 = vmatpush1.bf16.msra.mxu0 0
  %64 = vmatprep.subr.bf16.mxu0 0
  %65 = vmatpush1.bf16.msra.mxu0 0
  %66 = vmatprep.subr.bf16.mxu0 0
  %67 = vmatpush1.bf16.msra.mxu0 0
  %68 = vmatprep.subr.bf16.mxu0 0
  %69 = vmatpush1.bf16.msra.mxu0 0
  %70 = vmatprep.subr.bf16.mxu0 0
  %71 = vmatpush1.bf16.msra.mxu0 0
  %72 = vmatprep.subr.bf16.mxu0 0
  %73 = vmatpush1.bf16.msra.mxu0 0
  %74 = vmatprep.subr.bf16.mxu0 0
  %75 = vmatpush1.bf16.msra.mxu0 0
  %76 = vmatprep.subr.bf16.mxu0 0
  %77 = vmatpush1.bf16.msra.mxu0 0
  %78 = vmatprep.subr.bf16.mxu0 0
  %79 = vmatpush1.bf16.msra.mxu0 0
  %80 = vmatprep.subr.bf16.mxu0 0
  %81 = vmatpush1.bf16.msra.mxu0 0
  %82 = vmatprep.subr.bf16.mxu0 0
  %83 = vmatpush1.bf16.msra.mxu0 0
  %84 = vmatprep.subr.bf16.mxu0 0
  %85 = vmatpush1.bf16.msra.mxu0 0
  %86 = vmatprep.subr.bf16.mxu0 0
  %87 = vmatpush1.bf16.msra.mxu0 0
  %88 = vmatprep.subr.bf16.mxu0 0
  %89 = vmatpush1.bf16.msra.mxu0 0
  %90 = vmatprep.mubr.bf16.mxu0 0
  %91 = vmatmul.mubr.bf16.gmra.mrb[0].mxu0 %v56
  %v92 = vpop.f32.mrb[0].mxu0
  %v93 = vadd.f32 %v40, %v92
  %v94 = vpop.f32.mrb[0].mxu0
  %v95 = vpop.f32.mrb[0].mxu0
  %v96 = vpop.f32.mrb[0].mxu0
  %97 = vdwg.mxu0
  %98 = vst [vmem:[%s4] sm:$0xff] %v93
  %99 = vmax.xlane.f32.xlu0 %v93
  %v100 = vpop.xlane.xlu0 %99
  %v101 = vsub.f32 %v93, %v100
  %v102 = vmul.f32 %v101, 1.442695
  %v103 = vpow.pop %v102
  %104 = vadd.xlane.f32.xlu0 %v103
  %v105 = vpop.xlane.xlu0 %104
  %v106 = vlog2.pop %v105
  %v107 = vmul.f32 %v106, 0.6931472
  %v108 = vadd.f32 %v100, %v107
  %v109 = vmul.f32 %v93, %v34
  %110 = vadd.xlane.f32.xlu0 %v109
  %v111 = vpop.xlane.xlu0 %110
  %v112 = vsub.f32 %v108, %v111
  %v113 = vrot.slane %v112, 4
  %v114 = vadd.f32 %v112, %v113
  %v115 = vrot.slane %v114, 2
  %v116 = vadd.f32 %v114, %v115
  %v117 = vrot.slane %v116, 1
  %v118 = vadd.f32 %v116, %v117
  %v119 = vmul.f32 %v118, 0.125
  %v120 = vmul.f32 %v20, %v20
  %v121 = vsel %vm54, %v120, 0.0
  %122 = vadd.xlane.f32.xlu0 %v121
  %v123 = vpop.xlane.xlu0 %122
  %v124 = vmax.f32 %v123, 1e-16
  %v125 = vrsqrt.pop %v124
  %v126 = vmul.f32 %v20, %v125
  %v127 = vpack.c.bf16 %v126, %v126
  %v129 = vsel %vm54, %v127, 0
  %131 = vmatprep.subr.bf16.mxu0 0
  %132 = vmatpush1.bf16.xpose.msra.mxu0 %v129
  %133 = vmatprep.subr.bf16.mxu0 0
  %134 = vmatpush1.bf16.xpose.msra.mxu0 0
  %135 = vmatprep.subr.bf16.mxu0 0
  %136 = vmatpush1.bf16.xpose.msra.mxu0 0
  %137 = vmatprep.subr.bf16.mxu0 0
  %138 = vmatpush1.bf16.xpose.msra.mxu0 0
  %139 = vmatprep.subr.bf16.mxu0 0
  %140 = vmatpush1.bf16.xpose.msra.mxu0 0
  %141 = vmatprep.subr.bf16.mxu0 0
  %142 = vmatpush1.bf16.xpose.msra.mxu0 0
  %143 = vmatprep.subr.bf16.mxu0 0
  %144 = vmatpush1.bf16.xpose.msra.mxu0 0
  %145 = vmatprep.subr.bf16.mxu0 0
  %146 = vmatpush1.bf16.xpose.msra.mxu0 0
  %147 = vmatprep.subr.bf16.mxu0 0
  %148 = vmatpush1.bf16.xpose.msra.mxu0 0
  %149 = vmatprep.subr.bf16.mxu0 0
  %150 = vmatpush1.bf16.xpose.msra.mxu0 0
  %151 = vmatprep.subr.bf16.mxu0 0
  %152 = vmatpush1.bf16.xpose.msra.mxu0 0
  %153 = vmatprep.subr.bf16.mxu0 0
  %154 = vmatpush1.bf16.xpose.msra.mxu0 0
  %155 = vmatprep.subr.bf16.mxu0 0
  %156 = vmatpush1.bf16.xpose.msra.mxu0 0
  %157 = vmatprep.subr.bf16.mxu0 0
  %158 = vmatpush1.bf16.xpose.msra.mxu0 0
  %159 = vmatprep.subr.bf16.mxu0 0
  %160 = vmatpush1.bf16.xpose.msra.mxu0 0
  %161 = vmatprep.subr.bf16.mxu0 0
  %162 = vmatpush1.bf16.xpose.msra.mxu0 0
  %163 = vmatprep.mubr.bf16.mxu0 0
  %164 = vmatmul.mubr.bf16.gmra.mrb[0].mxu0 %v129
  %v165 = vpop.f32.mrb[0].mxu0
  %v166 = vadd.f32 0.0, %v165
  %v167 = vpop.f32.mrb[0].mxu0
  %v168 = vpop.f32.mrb[0].mxu0
  %v169 = vpop.f32.mrb[0].mxu0
  %170 = vdwg.mxu0
  %v171 = vmul.f32 %v166, 2.0
  %v172 = vlaneseq
  %v173 = vshrl.u32 %v172, 7
  %vm174 = vcmp.ne.s32.totalorder %v173, %v28
  %v175 = vsel %vm174, 1, 0
  %v176 = vcvt.s32.f32 %v175
  %vm177 = vcmp.gt.f32.partialorder %v176, 0.5
  %v178 = vsel %vm177, %v171, -1e+30
  %vm179 = vcmask 64512
  %v180 = vsel %vm179, %v178, -inf
  %181 = vmax.xlane.f32.xlu0 %v180
  %v182 = vpop.xlane.xlu0 %181
  %v183 = vsub.f32 %v171, %v182
  %v184 = vmul.f32 %v183, 1.442695
  %v185 = vpow.pop %v184
  %v186 = vmul.f32 %v185, %v176
  %v187 = vsel %vm179, %v186, 0.0
  %188 = vadd.xlane.f32.xlu0 %v187
  %v189 = vpop.xlane.xlu0 %188
  %v190 = vlog2.pop %v189
  %v191 = vmul.f32 %v190, 0.6931472
  %v192 = vadd.f32 %v191, %v182
  %v193 = vpack.c.bf16 %v34, %v34
  %194 = vmatprep.subr.bf16.mxu0 0
  %195 = vmatpush1.bf16.xpose.msra.mxu0 %v193
  %196 = vmatprep.subr.bf16.mxu0 0
  %197 = vmatpush1.bf16.xpose.msra.mxu0 0
  %198 = vmatprep.subr.bf16.mxu0 0
  %199 = vmatpush1.bf16.xpose.msra.mxu0 0
  %200 = vmatprep.subr.bf16.mxu0 0
  %201 = vmatpush1.bf16.xpose.msra.mxu0 0
  %202 = vmatprep.subr.bf16.mxu0 0
  %203 = vmatpush1.bf16.xpose.msra.mxu0 0
  %204 = vmatprep.subr.bf16.mxu0 0
  %205 = vmatpush1.bf16.xpose.msra.mxu0 0
  %206 = vmatprep.subr.bf16.mxu0 0
  %207 = vmatpush1.bf16.xpose.msra.mxu0 0
  %208 = vmatprep.subr.bf16.mxu0 0
  %209 = vmatpush1.bf16.xpose.msra.mxu0 0
  %210 = vmatprep.subr.bf16.mxu0 0
  %211 = vmatpush1.bf16.xpose.msra.mxu0 0
  %212 = vmatprep.subr.bf16.mxu0 0
  %213 = vmatpush1.bf16.xpose.msra.mxu0 0
  %214 = vmatprep.subr.bf16.mxu0 0
  %215 = vmatpush1.bf16.xpose.msra.mxu0 0
  %216 = vmatprep.subr.bf16.mxu0 0
  %217 = vmatpush1.bf16.xpose.msra.mxu0 0
  %218 = vmatprep.subr.bf16.mxu0 0
  %219 = vmatpush1.bf16.xpose.msra.mxu0 0
  %220 = vmatprep.subr.bf16.mxu0 0
  %221 = vmatpush1.bf16.xpose.msra.mxu0 0
  %222 = vmatprep.subr.bf16.mxu0 0
  %223 = vmatpush1.bf16.xpose.msra.mxu0 0
  %224 = vmatprep.subr.bf16.mxu0 0
  %225 = vmatpush1.bf16.xpose.msra.mxu0 0
  %226 = vmatprep.mubr.bf16.mxu0 0
  %227 = vmatmul.mubr.bf16.gmra.mrb[0].mxu0 %v193
  %v228 = vpop.f32.mrb[0].mxu0
  %v229 = vadd.f32 0.0, %v228
  %v230 = vpop.f32.mrb[0].mxu0
  %v231 = vpop.f32.mrb[0].mxu0
  %v232 = vpop.f32.mrb[0].mxu0
  %233 = vdwg.mxu0
  %v234 = vmul.f32 %v229, %v176
  %v235 = vsel %vm179, %v234, 0.0
  %236 = vadd.xlane.f32.xlu0 %v235
  %v237 = vpop.xlane.xlu0 %236
  %v238 = vsub.f32 %v171, %v192
  %v239 = vmul.f32 %v234, %v238
  %v240 = vsel %vm179, %v239, 0.0
  %241 = vadd.xlane.f32.xlu0 %v240
  %v242 = vpop.xlane.xlu0 %241
  %vm243 = vcmp.gt.f32.partialorder %v237, 0.5
  %v244 = vmax.f32 %v237, 1.0
  %v245 = vsub.f32 0.0, %v244
  %v246 = vrcp.pop %v245
  %v247 = vmul.f32 %v242, %v246
  %v248 = vsel %vm243, %v247, 0.0
  %v249 = vrot.slane %v248, 4
  %v250 = vadd.f32 %v248, %v249
  %v251 = vrot.slane %v250, 2
  %v252 = vadd.f32 %v250, %v251
  %v253 = vrot.slane %v252, 1
  %v254 = vadd.f32 %v252, %v253
  %v255 = vmul.f32 %v254, 0.125
  %vm256 = vcmp.eq.s32.totalorder %v28, 0
  %v257 = vsel %vm256, %v119, 0.0
  %vm258 = vcmp.eq.s32.totalorder %v28, 1
  %v259 = vsel %vm258, %v255, 0.0
  %v260 = vadd.f32 %v257, %v259
  %261 = vst [vmem:[%s5] sm:$0x1] %v260
  // Predicated region
  $region18: #{_forward_device.4} parent=0 // pred_check
    _
  $region19: #{_forward_device.4} parent=0 // pred_check_branch
    %263 = sbr.rel (0) target = $region21
  $region20: #{_forward_device.4} parent=0 // pred_region
    _
  $region21: #{_forward_device.4} parent=0 // pred_fallthru
    _
  // Predicated region
  $region22: #{_forward_device.4} parent=0 // pred_check
    _
  $region23: #{_forward_device.4} parent=0 // pred_check_branch
    %265 = sbr.rel (0) target = $region25
  $region24: #{_forward_device.4} parent=0 // pred_region
    _
  $region25: #{_forward_device.4} parent=0 // pred_fallthru
    _
  // Predicated region
  $region26: #{_forward_device.4} parent=0 // pred_check
    _
  $region27: #{_forward_device.4} parent=0 // pred_check_branch
    %267 = sbr.rel (0) target = $region29
  $region28: #{_forward_device.4} parent=0 // pred_region
    _
  $region29: #{_forward_device.4} parent=0 // pred_fallthru
    _
  // Predicated region
  $region30: #{_forward_device.4} parent=0 // pred_check
    _
  $region31: #{_forward_device.4} parent=0 // pred_check_branch
    %269 = sbr.rel (0) target = $region33
  $region32: #{_forward_device.4} parent=0 // pred_region
    _
  $region33: #{_forward_device.4} parent=0 // pred_fallthru
    _

// kernel: _forward_device.5
$region0: #{_forward_device.5}
  #allocation0 [shape = 'u32[]', space=smem, size = 0x4, offset = 0x4, fixed_abs, tag = 'smem constant byte address 0x4 - core index']
  #allocation1 [shape = 'u32[144,128]{1,0:T(1,128)}', space=vmem, size = 0x12000, scoped, tag = 'internal scratch']
  %s0 = inlined_call_operand.vmem [shape: f32[8,32], index: 0, kind: input, shape index: {}]
  %s1 = inlined_call_operand.vmem [shape: bf16[32,128], index: 1, kind: input, shape index: {}]
  %s2 = inlined_call_operand.vmem [shape: f32[1,128], index: 2, kind: input, shape index: {}]
  %s3 = inlined_call_operand.vmem [shape: s32[8,4], index: 3, kind: input, shape index: {}]
  %s4 = inlined_call_operand.vmem [shape: f32[8,32], index: 4, kind: input, shape index: {}]
  %s5 = inlined_call_operand.vmem [shape: f32[1,128], index: 5, kind: output, shape index: {}]
  %s6 = sld [smem:[#allocation0]]
  $region30: #{_forward_device.5} parent=0
    _
  %s8 = ssub.s32 1, %s6
  %s9 = scalar_select 0, %s8, %s6
  // Predicated region
  $region2: #{_forward_device.5} parent=0 // pred_check
    _
  $region3: #{_forward_device.5} parent=0 // pred_check_branch
    %11 = sbr.rel (0) target = $region5
  $region4: #{_forward_device.5} parent=0 // pred_region
    _
  $region5: #{_forward_device.5} parent=0 // pred_fallthru
    _
  // Predicated region
  $region6: #{_forward_device.5} parent=0 // pred_check
    _
  $region7: #{_forward_device.5} parent=0 // pred_check_branch
    %13 = sbr.rel (0) target = $region9
  $region8: #{_forward_device.5} parent=0 // pred_region
    _
  $region9: #{_forward_device.5} parent=0 // pred_fallthru
    _
  // Predicated region
  $region10: #{_forward_device.5} parent=0 // pred_check
    _
  $region11: #{_forward_device.5} parent=0 // pred_check_branch
    %15 = sbr.rel (0) target = $region13
  $region12: #{_forward_device.5} parent=0 // pred_region
    _
  $region13: #{_forward_device.5} parent=0 // pred_fallthru
    _
  // Predicated region
  $region14: #{_forward_device.5} parent=0 // pred_check
    _
  $region15: #{_forward_device.5} parent=0 // pred_check_branch
    %17 = sbr.rel (0) target = $region17
  $region16: #{_forward_device.5} parent=0 // pred_region
    _
  $region17: #{_forward_device.5} parent=0 // pred_fallthru
    _
  // Predicated region
  $region18: #{_forward_device.5} parent=0 // pred_check
    _
  $region19: #{_forward_device.5} parent=0 // pred_check_branch
    %19 = sbr.rel (0) target = $region21
  $region20: #{_forward_device.5} parent=0 // pred_region
    _
  $region21: #{_forward_device.5} parent=0 // pred_fallthru
    _
  %v21 = vld [vmem:[%s0] sm:$0xff]
  %v22 = vld [vmem:[%s3] sm:$0xff]
  %v23 = vld [vmem:[%s4] sm:$0xff]
  %v24 = vlaneseq
  %v25 = vand.u32 %v24, 127
  %26 = vset.pattern.permute.xlu0 0
  %27 = vperm.xlu0 %26, %v22
  %v28 = vpop.permute.xlu0 %27
  %vm29 = vcmp.eq.s32.totalorder %v25, %v28
  %v30 = vsel %vm29, 1, 0
  %v31 = vcvt.s32.f32 %v30
  %v32 = vpack.c.bf16 %v31, %v31
  %33 = vset.pattern.permute.xlu0 1
  %34 = vperm.xlu0 %33, %v22
  %v35 = vpop.permute.xlu0 %34
  %vm36 = vcmp.eq.s32.totalorder %v25, %v35
  %v37 = vsel %vm36, 1, 0
  %v38 = vcvt.s32.f32 %v37
  %v39 = vpack.c.bf16 %v38, %v38
  %v40 = vpack.c.bf16 %v21, %v21
  %vm41 = vcmask 64512
  %v43 = vsel %vm41, %v32, 0
  %vm45 = vcmask 1043456
  %v47 = vsel %vm45, %v40, 0
  %49 = vmatprep.subr.bf16.mxu0 0
  %50 = vmatpush1.bf16.msra.mxu0 %v47
  %51 = vmatprep.subr.bf16.mxu0 0
  %52 = vmatpush1.bf16.msra.mxu0 0
  %53 = vmatprep.subr.bf16.mxu0 0
  %54 = vmatpush1.bf16.msra.mxu0 0
  %55 = vmatprep.subr.bf16.mxu0 0
  %56 = vmatpush1.bf16.msra.mxu0 0
  %57 = vmatprep.subr.bf16.mxu0 0
  %58 = vmatpush1.bf16.msra.mxu0 0
  %59 = vmatprep.subr.bf16.mxu0 0
  %60 = vmatpush1.bf16.msra.mxu0 0
  %61 = vmatprep.subr.bf16.mxu0 0
  %62 = vmatpush1.bf16.msra.mxu0 0
  %63 = vmatprep.subr.bf16.mxu0 0
  %64 = vmatpush1.bf16.msra.mxu0 0
  %65 = vmatprep.subr.bf16.mxu0 0
  %66 = vmatpush1.bf16.msra.mxu0 0
  %67 = vmatprep.subr.bf16.mxu0 0
  %68 = vmatpush1.bf16.msra.mxu0 0
  %69 = vmatprep.subr.bf16.mxu0 0
  %70 = vmatpush1.bf16.msra.mxu0 0
  %71 = vmatprep.subr.bf16.mxu0 0
  %72 = vmatpush1.bf16.msra.mxu0 0
  %73 = vmatprep.subr.bf16.mxu0 0
  %74 = vmatpush1.bf16.msra.mxu0 0
  %75 = vmatprep.subr.bf16.mxu0 0
  %76 = vmatpush1.bf16.msra.mxu0 0
  %77 = vmatprep.subr.bf16.mxu0 0
  %78 = vmatpush1.bf16.msra.mxu0 0
  %79 = vmatprep.subr.bf16.mxu0 0
  %80 = vmatpush1.bf16.msra.mxu0 0
  %81 = vmatprep.mubr.bf16.mxu0 0
  %82 = vmatmul.mubr.bf16.gmra.mrb[0].mxu0 %v43
  %v83 = vpop.f32.mrb[0].mxu0
  %v84 = vadd.f32 0.0, %v83
  %v85 = vpop.f32.mrb[0].mxu0
  %v86 = vpop.f32.mrb[0].mxu0
  %v87 = vpop.f32.mrb[0].mxu0
  %88 = vdwg.mxu0
  %v90 = vsel %vm41, %v39, 0
  %92 = vmatprep.subr.bf16.mxu0 0
  %93 = vmatpush1.bf16.msra.mxu0 %v47
  %94 = vmatprep.subr.bf16.mxu0 0
  %95 = vmatpush1.bf16.msra.mxu0 0
  %96 = vmatprep.subr.bf16.mxu0 0
  %97 = vmatpush1.bf16.msra.mxu0 0
  %98 = vmatprep.subr.bf16.mxu0 0
  %99 = vmatpush1.bf16.msra.mxu0 0
  %100 = vmatprep.subr.bf16.mxu0 0
  %101 = vmatpush1.bf16.msra.mxu0 0
  %102 = vmatprep.subr.bf16.mxu0 0
  %103 = vmatpush1.bf16.msra.mxu0 0
  %104 = vmatprep.subr.bf16.mxu0 0
  %105 = vmatpush1.bf16.msra.mxu0 0
  %106 = vmatprep.subr.bf16.mxu0 0
  %107 = vmatpush1.bf16.msra.mxu0 0
  %108 = vmatprep.subr.bf16.mxu0 0
  %109 = vmatpush1.bf16.msra.mxu0 0
  %110 = vmatprep.subr.bf16.mxu0 0
  %111 = vmatpush1.bf16.msra.mxu0 0
  %112 = vmatprep.subr.bf16.mxu0 0
  %113 = vmatpush1.bf16.msra.mxu0 0
  %114 = vmatprep.subr.bf16.mxu0 0
  %115 = vmatpush1.bf16.msra.mxu0 0
  %116 = vmatprep.subr.bf16.mxu0 0
  %117 = vmatpush1.bf16.msra.mxu0 0
  %118 = vmatprep.subr.bf16.mxu0 0
  %119 = vmatpush1.bf16.msra.mxu0 0
  %120 = vmatprep.subr.bf16.mxu0 0
  %121 = vmatpush1.bf16.msra.mxu0 0
  %122 = vmatprep.subr.bf16.mxu0 0
  %123 = vmatpush1.bf16.msra.mxu0 0
  %124 = vmatprep.mubr.bf16.mxu0 0
  %125 = vmatmul.mubr.bf16.gmra.mrb[0].mxu0 %v90
  %v126 = vpop.f32.mrb[0].mxu0
  %v127 = vadd.f32 0.0, %v126
  %v128 = vpop.f32.mrb[0].mxu0
  %v129 = vpop.f32.mrb[0].mxu0
  %v130 = vpop.f32.mrb[0].mxu0
  %131 = vdwg.mxu0
  %132 = vset.pattern.permute.xlu0 2
  %133 = vperm.xlu0 %132, %v22
  %v134 = vpop.permute.xlu0 %133
  %vm135 = vcmp.eq.s32.totalorder %v25, %v134
  %v136 = vsel %vm135, 1, 0
  %v137 = vcvt.s32.f32 %v136
  %v138 = vsub.f32 %v84, %v127
  %v139 = vmul.f32 %v23, %v138
  %v140 = vadd.f32 %v84, %v139
  %v141 = vpack.c.bf16 %v140, %v140
  %v142 = vld [vmem:[%s1] sm:$0xf]
  %v143 = vld [vmem:[%s1 + $0x4] sm:$0xf]
  %v144 = vld [vmem:[%s1 + $0x8] sm:$0xf]
  %v145 = vld [vmem:[%s1 + $0xc] sm:$0xf]
  %v146 = vld [vmem:[%s2] sm:$0x1]
  %v148 = vlaneseq
  %v149 = vshrl.u32 %v148, 7
  %v150 = vsub.s32 0, %v149
  %v151 = vrot.slane %v146, %v150
  %v157 = vunpack.c.l.b16 %v142
  %v158 = vunpack.c.l.b16 %v143
  %v159 = vunpack.c.l.b16 %v144
  %v160 = vunpack.c.l.b16 %v145
  %v161 = vpack.c.b16 %v158, %v157
  %v162 = vpack.c.b16 %v160, %v159
  %vm165 = vcmask 261120
  %v167 = vsel %vm165, %v141, 0
  %169 = vmatprep.subr.bf16.mxu0 0
  %170 = vmatpush1.bf16.msra.mxu0 %v161
  %171 = vmatprep.subr.bf16.mxu0 0
  %172 = vmatpush1.bf16.msra.mxu0 %v162
  %173 = vmatprep.subr.bf16.mxu0 0
  %174 = vmatpush1.bf16.msra.mxu0 0
  %175 = vmatprep.subr.bf16.mxu0 0
  %176 = vmatpush1.bf16.msra.mxu0 0
  %177 = vmatprep.subr.bf16.mxu0 0
  %178 = vmatpush1.bf16.msra.mxu0 0
  %179 = vmatprep.subr.bf16.mxu0 0
  %180 = vmatpush1.bf16.msra.mxu0 0
  %181 = vmatprep.subr.bf16.mxu0 0
  %182 = vmatpush1.bf16.msra.mxu0 0
  %183 = vmatprep.subr.bf16.mxu0 0
  %184 = vmatpush1.bf16.msra.mxu0 0
  %185 = vmatprep.subr.bf16.mxu0 0
  %186 = vmatpush1.bf16.msra.mxu0 0
  %187 = vmatprep.subr.bf16.mxu0 0
  %188 = vmatpush1.bf16.msra.mxu0 0
  %189 = vmatprep.subr.bf16.mxu0 0
  %190 = vmatpush1.bf16.msra.mxu0 0
  %191 = vmatprep.subr.bf16.mxu0 0
  %192 = vmatpush1.bf16.msra.mxu0 0
  %193 = vmatprep.subr.bf16.mxu0 0
  %194 = vmatpush1.bf16.msra.mxu0 0
  %195 = vmatprep.subr.bf16.mxu0 0
  %196 = vmatpush1.bf16.msra.mxu0 0
  %197 = vmatprep.subr.bf16.mxu0 0
  %198 = vmatpush1.bf16.msra.mxu0 0
  %199 = vmatprep.subr.bf16.mxu0 0
  %200 = vmatpush1.bf16.msra.mxu0 0
  %201 = vmatprep.mubr.bf16.mxu0 0
  %202 = vmatmul.mubr.bf16.gmra.mrb[0].mxu0 %v167
  %v203 = vpop.f32.mrb[0].mxu0
  %v204 = vadd.f32 %v151, %v203
  %v205 = vpop.f32.mrb[0].mxu0
  %v206 = vpop.f32.mrb[0].mxu0
  %v207 = vpop.f32.mrb[0].mxu0
  %208 = vdwg.mxu0
  %209 = vmax.xlane.f32.xlu0 %v204
  %v210 = vpop.xlane.xlu0 %209
  %v211 = vsub.f32 %v204, %v210
  %v212 = vmul.f32 %v211, 1.442695
  %v213 = vpow.pop %v212
  %214 = vadd.xlane.f32.xlu0 %v213
  %v215 = vpop.xlane.xlu0 %214
  %v216 = vlog2.pop %v215
  %v217 = vmul.f32 %v216, 0.6931472
  %v218 = vadd.f32 %v210, %v217
  %v219 = vmul.f32 %v204, %v137
  %220 = vadd.xlane.f32.xlu0 %v219
  %v221 = vpop.xlane.xlu0 %220
  %v222 = vsub.f32 %v218, %v221
  %v223 = vrot.slane %v222, 4
  %v224 = vadd.f32 %v222, %v223
  %v225 = vrot.slane %v224, 2
  %v226 = vadd.f32 %v224, %v225
  %v227 = vrot.slane %v226, 1
  %v228 = vadd.f32 %v226, %v227
  %v229 = vmul.f32 %v228, 0.125
  %vm230 = vcmp.eq.s32.totalorder %v25, 0
  %v231 = vsel %vm230, %v229, 0.0
  %232 = vst [vmem:[%s5] sm:$0x1] %v231
  // Predicated region
  $region22: #{_forward_device.5} parent=0 // pred_check
    _
  $region23: #{_forward_device.5} parent=0 // pred_check_branch
    %234 = sbr.rel (0) target = $region25
  $region24: #{_forward_device.5} parent=0 // pred_region
    _
  $region25: #{_forward_device.5} parent=0 // pred_fallthru
    _
  // Predicated region
  $region26: #{_forward_device.5} parent=0 // pred_check
    _
  $region27: #{_forward_device.5} parent=0 // pred_check_branch
    %236 = sbr.rel (0) target = $region29
  $region28: #{_forward_device.5} parent=0 // pred_region
    _
  $region29: #{_forward_device.5} parent=0 // pred_fallthru
    _

</llo_original>
